<compile_context>
chip_gen: v7x
topology: tpu7x:2x2x1
jax: 0.10.0
libtpu: 0.0.40
codegen_flags: <defaults>
</compile_context>

<pallas_src>
import functools

import jax
import jax.numpy as jnp
import numpy as np
from jax.experimental import pallas as pl
from jax.experimental.pallas import tpu as pltpu

NEG_SLOPE = 0.01   # nn.LeakyReLU default negative_slope
BN_EPS = 1e-5      # nn.BatchNorm1d default eps


def _leaky(x):
    # Exactly equal to where(x>=0, x, slope*x) for 0 < slope < 1.
    return jnp.maximum(x, NEG_SLOPE * x)


def _ceil_to(n, m):
    return ((n + m - 1) // m) * m


def _dims(B, C, L):
    L1 = L - 2          # after Conv1d(k=3, pad=0)
    L2 = L1 // 2        # after MaxPool1d(2)
    L3 = L2 - 2         # after second Conv1d(k=3, pad=0)
    SPAN2 = (2 * L3 - 1) * B   # lane span of the (non-compacted) conv2 output
    return L1, L2, L3, SPAN2


# ----------------------------- slab layout ------------------------------------
def _slab_layout(B, C, L):
    """Row layout of the single packed parameter slab (all offsets static)."""
    D = L
    C4 = C // 4
    _, _, _, SPAN2 = _dims(B, C, L)
    entries = [
        ("w1_cat",    (C, 3 * C)),        # conv1 taps merged, BN1 folded
        ("w2_cat",    (C, 3 * C)),        # conv2 taps merged, BN2 folded
        ("pool_P",    (SPAN2, B)),        # per-batch valid-column sum (avg pool)
        ("fc1wT",     (C, C4)),           # fc1 weight^T, 1/L3 folded in
        ("fc2wT",     (C4, D)),           # fc2 weight^T
        ("fwT_tiled", (B * C, D)),        # frame depthwise weight^T, BN folded, tiled B
        ("ones_sel",  (B, B * C)),        # per-batch channel-sum selector
        ("regwT",     (2 * D, 2)),        # regressor weight^T (no bias)
        ("shift1",    (C, 1)),            # conv1 bias*scale + BN shift
        ("shift2",    (C, 1)),
        ("fc1b",      (1, C4)),
        ("fc2b",      (1, D)),
        ("fb",        (1, D)),            # frame bias*scale + BN shift
    ]
    layout = {}
    row = 0
    max_cols = 1
    for name, (r, c) in entries:
        layout[name] = (row, r, c)
        row += _ceil_to(r, 8)             # keep every block sublane-aligned
        max_cols = max(max_cols, c)
    return layout, row, max_cols


# ------------------------------- kernel ---------------------------------------
def _valar_kernel(layout, B, C, L, x_ref, slab_ref, out_ref):
    L1, L2, L3, SPAN2 = _dims(B, C, L)
    D = L
    f32 = jnp.float32
    C_pad = _ceil_to(C, 8)

    def get(name):
        r0, r, c = layout[name]
        return slab_ref[r0:r0 + r, 0:c]

    # Two static views of the single packed activation input.
    x_il = x_ref[0:C, 0:B * L]                  # (C, L*B)  lanes = l*B + b
    x_bs = x_ref[C_pad:C_pad + B * C, 0:L]      # (B*C, L)  sublanes = b*C + c

    # ----------------------------- video branch -------------------------------
    # Conv1d(C, C, k=3): taps merged on sublanes, all batches on lanes.
    xcat1 = jnp.concatenate(
        [x_il[:, t * B: t * B + B * L1] for t in range(3)], axis=0)      # (3C, B*L1)
    y1 = _leaky(jnp.dot(get("w1_cat"), xcat1, preferred_element_type=f32)
                + get("shift1"))                                         # (C, B*L1)

    # MaxPool1d(2): lane-shift by B + elementwise max (no MXU work).
    # Valid pooled values live at columns (2*l2)*B + b; odd blocks are garbage
    # and are ignored downstream (conv2 taps / pool_P only read valid columns).
    pm = jnp.maximum(y1[:, :B * (L1 - 1)], y1[:, B:B * L1])              # (C, B*(L1-1))

    # Second Conv1d on the non-compacted layout: tap stride is 2B.
    xcat2 = jnp.concatenate(
        [pm[:, 2 * t * B: 2 * t * B + SPAN2] for t in range(3)], axis=0)  # (3C, SPAN2)
    y3 = _leaky(jnp.dot(get("w2_cat"), xcat2, preferred_element_type=f32)
                + get("shift2"))                                         # (C, SPAN2)

    # AdaptiveAvgPool1d(1): per-batch sum over valid columns (1/L3 folded into
    # fc1wT), then one tiny (C, B) flip to put batch on sublanes.
    pooled = jnp.dot(y3, get("pool_P"), preferred_element_type=f32)      # (C, B)
    pooled_r = pooled.T                                                  # (B, C)

    h = _leaky(jnp.dot(pooled_r, get("fc1wT"), preferred_element_type=f32)
               + get("fc1b"))                                            # (B, C//4)
    video = _leaky(jnp.dot(h, get("fc2wT"), preferred_element_type=f32)
                   + get("fc2b"))                                        # (B, D)

    # ----------------------------- frame branch -------------------------------
    # Depthwise Conv1d(k=C, groups=D) over the encoding dim, BN folded into
    # fwT_tiled / fb; per-batch channel sums with one selector matmul.
    prod = x_bs * get("fwT_tiled")                                       # (B*C, D)
    frame = _leaky(jnp.dot(get("ones_sel"), prod,
                           preferred_element_type=f32) + get("fb"))      # (B, D)

    # ------------------------- concat + regressor -----------------------------
    feats = jnp.concatenate([video, frame], axis=1)                      # (B, 2D)
    pred = jnp.tanh(jnp.dot(feats, get("regwT"),
                            preferred_element_type=f32))                 # (B, 2)

    # Single lane-padded output store: [feats | pred | zero pad] -> (B, OUT_COLS)
    pieces = [feats, pred]
    pad = out_ref.shape[1] - (2 * D + 2)
    if pad > 0:
        pieces.append(jnp.zeros((B, pad), f32))
    out_ref[...] = jnp.concatenate(pieces, axis=1)


# ------------------------- parameters (deterministic) -------------------------
def init_params(key, encoding_dim, compressed_dim):
    C, D = encoding_dim, compressed_dim
    C4 = C // 4
    ks = jax.random.split(key, 11)

    def u(k, shape, fan_in):
        bnd = 1.0 / (fan_in ** 0.5)
        return jax.random.uniform(k, shape, jnp.float32, minval=-bnd, maxval=bnd)

    p = {
        # VideoBranch convs: weights stored as (k=3, C_out, C_in)
        "vconv1_w": u(ks[0], (3, C, C), C * 3),
        "vconv1_b": u(ks[1], (C, 1), C * 3),
        "vconv2_w": u(ks[2], (3, C, C), C * 3),
        "vconv2_b": u(ks[3], (C, 1), C * 3),
        # VideoBranch fc layers
        "fc1_w": u(ks[4], (C4, C), C),
        "fc1_b": u(ks[5], (C4, 1), C),
        "fc2_w": u(ks[6], (D, C4), C4),
        "fc2_b": u(ks[7], (D, 1), C4),
        # FrameBranch grouped conv: PyTorch weight (D, 1, C) squeezed to (D, C)
        "fconv_w": u(ks[8], (D, C), C),
        "fconv_b": u(ks[9], (D, 1), C),
        # regressor: Linear(2D, 2, bias=False)
        "reg_w": u(ks[10], (2, 2 * D), 2 * D),
        # BatchNorm1d params / running stats (PyTorch defaults, inference mode)
        "bn1_gamma": jnp.ones((C, 1), jnp.float32), "bn1_beta": jnp.zeros((C, 1), jnp.float32),
        "bn1_mean": jnp.zeros((C, 1), jnp.float32), "bn1_var": jnp.ones((C, 1), jnp.float32),
        "bn2_gamma": jnp.ones((C, 1), jnp.float32), "bn2_beta": jnp.zeros((C, 1), jnp.float32),
        "bn2_mean": jnp.zeros((C, 1), jnp.float32), "bn2_var": jnp.ones((C, 1), jnp.float32),
        "fbn_gamma": jnp.ones((D, 1), jnp.float32), "fbn_beta": jnp.zeros((D, 1), jnp.float32),
        "fbn_mean": jnp.zeros((D, 1), jnp.float32), "fbn_var": jnp.ones((D, 1), jnp.float32),
    }
    return p


# --------------------------- offline parameter packing ------------------------
def pack_params(params, B):
    """Fold BN / avg-pool factors, merge conv taps, build the tiny selector
    matrices and pack everything into one f32 slab (once, off the hot path)."""
    C = params["vconv1_w"].shape[1]
    D = params["fconv_w"].shape[0]
    L = D                    # frame branch requires x.shape[-1] == compressed_dim
    L1, L2, L3, SPAN2 = _dims(B, C, L)
    assert L3 >= 1, "compressed_dim too small for the conv stack"
    layout, rows, cols = _slab_layout(B, C, L)
    slab = np.zeros((rows, cols), np.float32)

    def put(name, val):
        r0, r, c = layout[name]
        v = np.asarray(val, np.float32)
        assert v.shape == (r, c), (name, v.shape, (r, c))
        slab[r0:r0 + r, :c] = v

    def bn_fold(pfx):
        g = np.asarray(params[pfx + "_gamma"], np.float32)
        b = np.asarray(params[pfx + "_beta"], np.float32)
        m = np.asarray(params[pfx + "_mean"], np.float32)
        v = np.asarray(params[pfx + "_var"], np.float32)
        s = g / np.sqrt(v + BN_EPS)
        return s, b - m * s                       # shapes (N, 1)

    s1, sh1 = bn_fold("bn1")
    s2, sh2 = bn_fold("bn2")
    fs, fsh = bn_fold("fbn")

    def conv_cat(w, s):                           # w (3, C, C) [t, o, c]
        w = np.asarray(w, np.float32)
        return (s[:, :, None] * np.transpose(w, (1, 0, 2))).reshape(C, 3 * C)

    put("w1_cat", conv_cat(params["vconv1_w"], s1))
    put("w2_cat", conv_cat(params["vconv2_w"], s2))
    put("shift1", s1 * np.asarray(params["vconv1_b"], np.float32) + sh1)
    put("shift2", s2 * np.asarray(params["vconv2_b"], np.float32) + sh2)

    # AdaptiveAvgPool selector over the valid (stride-2B) conv2 columns.
    P = np.zeros((SPAN2, B), np.float32)
    for l3 in range(L3):
        for b in range(B):
            P[2 * l3 * B + b, b] = 1.0
    put("pool_P", P)

    # fc layers; the AdaptiveAvgPool 1/L3 factor is folded into fc1.
    put("fc1wT", np.asarray(params["fc1_w"], np.float32).T / float(L3))
    put("fc1b", np.asarray(params["fc1_b"], np.float32).T)
    put("fc2wT", np.asarray(params["fc2_w"], np.float32).T)
    put("fc2b", np.asarray(params["fc2_b"], np.float32).T)

    # frame branch: fold BN scale into the depthwise weight/bias.
    fw = np.asarray(params["fconv_w"], np.float32) * fs          # (D, C)
    put("fwT_tiled", np.tile(fw.T, (B, 1)))                      # (B*C, D)
    put("fb", (fs * np.asarray(params["fconv_b"], np.float32) + fsh).T)

    ones_sel = np.zeros((B, B * C), np.float32)
    for b in range(B):
        ones_sel[b, b * C:(b + 1) * C] = 1.0
    put("ones_sel", ones_sel)

    put("regwT", np.asarray(params["reg_w"], np.float32).T)      # (2D, 2)

    return jnp.asarray(slab)


# ------------------------------- wrapper -------------------------------------
def make_valar_forward(B, C, L):
    assert C % 4 == 0, "encoding_dim must be divisible by 4 (fc1)"
    L1, L2, L3, _ = _dims(B, C, L)
    assert L3 >= 1, "compressed_dim too small for the conv stack"
    D = L
    layout, _, _ = _slab_layout(B, C, L)
    kernel = functools.partial(_valar_kernel, layout, B, C, L)
    vmem = pl.BlockSpec(memory_space=pltpu.MemorySpace.VMEM)
    C_pad = _ceil_to(C, 8)
    BC_pad = _ceil_to(B * C, 8)
    OUT_COLS = _ceil_to(2 * D + 2, 128)          # lane-dense single output

    @jax.jit
    def forward(x, slab):
        assert x.shape == (B, C, L)
        # Single producer fusion builds ONE packed activation slab holding both
        # views of x (no standalone transpose kernel, one input DMA).
        x_il = jnp.transpose(x, (1, 2, 0)).reshape(C, L * B)     # (C, L*B) l-major, b-minor
        x_bs = x.reshape(B * C, L)                               # (B*C, L) b-major sublanes
        x_il = jnp.pad(x_il, ((0, C_pad - C), (0, 0)))
        x_bs = jnp.pad(x_bs, ((0, BC_pad - B * C), (0, B * L - L)))
        xpack = jnp.concatenate([x_il, x_bs], axis=0)            # (C_pad+BC_pad, B*L)

        packed = pl.pallas_call(
            kernel,
            out_shape=jax.ShapeDtypeStruct((B, OUT_COLS), jnp.float32),
            in_specs=[vmem, vmem],                # 2 input DMAs total
            out_specs=vmem,                       # 1 output DMA total
            compiler_params=pltpu.CompilerParams(
                vmem_limit_bytes=4 * 1024 * 1024),
        )(xpack, slab)
        feats = packed[:, :2 * D]
        out = packed[:, 2 * D:2 * D + 2]
        return out, feats

    return forward


# --------------------------- pure-JAX reference -------------------------------
def reference_forward(x, params):
    B, C, L = x.shape
    D = params["fconv_w"].shape[0]

    def leaky(v):
        return jnp.where(v >= 0, v, NEG_SLOPE * v)

    def bn(v, pfx):
        g, b = params[pfx + "_gamma"][:, 0], params[pfx + "_beta"][:, 0]
        m, var = params[pfx + "_mean"][:, 0], params[pfx + "_var"][:, 0]
        s = g / jnp.sqrt(var + BN_EPS)
        sh = b - m * s
        if v.ndim == 3:
            return v * s[None, :, None] + sh[None, :, None]
        return v * s[None, :] + sh[None, :]

    def conv3(xin, w, b):
        Lo = xin.shape[-1] - 2
        out = jnp.zeros((B, C, Lo), jnp.float32) + b[None, :, :]
        for t in range(3):
            out = out + jnp.einsum("oc,bcl->bol", w[t], xin[:, :, t:t + Lo])
        return out

    with jax.default_matmul_precision("float32"):
        y1 = leaky(bn(conv3(x, params["vconv1_w"], params["vconv1_b"]), "bn1"))
        Lp = y1.shape[-1] // 2
        y2 = jnp.max(y1[:, :, :2 * Lp].reshape(B, C, Lp, 2), axis=-1)
        y3 = leaky(bn(conv3(y2, params["vconv2_w"], params["vconv2_b"]), "bn2"))
        pooled = jnp.mean(y3, axis=-1)                                    # (B, C)
        h = leaky(pooled @ params["fc1_w"].T + params["fc1_b"][:, 0])
        video = leaky(h @ params["fc2_w"].T + params["fc2_b"][:, 0])      # (B, D)

        sw = jnp.swapaxes(x, -2, -1)                                      # (B, D, C)
        fpre = jnp.sum(sw * params["fconv_w"][None], axis=-1) + params["fconv_b"][:, 0]
        frame = leaky(bn(fpre, "fbn"))                                    # (B, D)

        feats = jnp.concatenate([video, frame], axis=1)                   # (B, 2D)
        out = jnp.tanh(feats @ params["reg_w"].T)                         # (B, 2)
    return out, feats


if __name__ == "__main__":
    B, encoding_dim, compressed_dim = 2, 16, 32
    key = jax.random.PRNGKey(0)
    kx, kp = jax.random.split(key)
    # PyTorch forward expects (B, encoding_dim, compressed_dim)  [NCL]
    x = jax.random.normal(kx, (B, encoding_dim, compressed_dim), jnp.float32)
    params = init_params(kp, encoding_dim, compressed_dim)

    slab = pack_params(params, B)                        # one-time packing
    forward = make_valar_forward(B, encoding_dim, compressed_dim)

    out, feats = forward(x, slab)
    jax.block_until_ready((out, feats))

    ref_out, ref_feats = reference_forward(x, params)
    assert out.shape == (B, 2) and feats.shape == (B, 2 * compressed_dim)
    np.testing.assert_allclose(np.asarray(out), np.asarray(ref_out), rtol=1e-3, atol=1e-3)
    np.testing.assert_allclose(np.asarray(feats), np.asarray(ref_feats), rtol=1e-3, atol=1e-3)
    print("KERNEL_OK")
</pallas_src>

<mosaic_0001>
module attributes {stable_mosaic.version = 11 : i64} {
  func.func @_valar_kernel(%arg0: memref<48x64xf32, #tpu.memory_space<vmem>>, %arg1: memref<272x48xf32, #tpu.memory_space<vmem>>, %arg2: memref<2x128xf32, #tpu.memory_space<vmem>>) attributes {dimension_semantics = [], scalar_prefetch = 0 : i64, scratch_operands = 0 : i64, tpu.core_type = #tpu.core_type<tc>} {
    %c0 = arith.constant 0 : index
    %c0_0 = arith.constant 0 : index
    %0 = vector.load %arg0[%c0, %c0_0] : memref<48x64xf32, #tpu.memory_space<vmem>>, vector<16x64xf32>
    %c16 = arith.constant 16 : index
    %c0_1 = arith.constant 0 : index
    %1 = vector.load %arg0[%c16, %c0_1] : memref<48x64xf32, #tpu.memory_space<vmem>>, vector<32x32xf32>
    %2 = vector.extract_strided_slice %0 {offsets = [0, 0], sizes = [16, 60], strides = [1, 1]} : vector<16x64xf32> to vector<16x60xf32>
    %3 = vector.extract_strided_slice %0 {offsets = [0, 2], sizes = [16, 60], strides = [1, 1]} : vector<16x64xf32> to vector<16x60xf32>
    %4 = vector.extract_strided_slice %0 {offsets = [0, 4], sizes = [16, 60], strides = [1, 1]} : vector<16x64xf32> to vector<16x60xf32>
    %5 = tpu.concatenate %2, %3, %4 in 0 : vector<16x60xf32>, vector<16x60xf32>, vector<16x60xf32> -> vector<48x60xf32>
    %c0_2 = arith.constant 0 : index
    %c0_3 = arith.constant 0 : index
    %6 = vector.load %arg1[%c0_2, %c0_3] : memref<272x48xf32, #tpu.memory_space<vmem>>, vector<16x48xf32>
    %cst = arith.constant dense<0.000000e+00> : vector<16x60xf32>
    %7 = tpu.matmul %6, %5, %cst {dimension_numbers = #tpu.dot_dimension_numbers<[1], [0], [0], [1], [0, 0, 1, 1], [], []>} : vector<16x48xf32>, vector<48x60xf32>, vector<16x60xf32> -> vector<16x60xf32>
    %c216 = arith.constant 216 : index
    %c0_4 = arith.constant 0 : index
    %8 = vector.load %arg1[%c216, %c0_4] : memref<272x48xf32, #tpu.memory_space<vmem>>, vector<16x1xf32>
    %9 = vector.broadcast %8 : vector<16x1xf32> to vector<16x60xf32>
    %10 = arith.addf %7, %9 : vector<16x60xf32>
    %cst_5 = arith.constant 0.00999999977 : f32
    %11 = vector.broadcast %cst_5 : f32 to vector<16x60xf32>
    %12 = arith.mulf %11, %10 : vector<16x60xf32>
    %13 = arith.maximumf %10, %12 : vector<16x60xf32>
    %14 = vector.extract_strided_slice %13 {offsets = [0, 0], sizes = [16, 58], strides = [1, 1]} : vector<16x60xf32> to vector<16x58xf32>
    %15 = vector.extract_strided_slice %13 {offsets = [0, 2], sizes = [16, 58], strides = [1, 1]} : vector<16x60xf32> to vector<16x58xf32>
    %16 = arith.maximumf %14, %15 : vector<16x58xf32>
    %17 = vector.extract_strided_slice %16 {offsets = [0, 0], sizes = [16, 50], strides = [1, 1]} : vector<16x58xf32> to vector<16x50xf32>
    %18 = vector.extract_strided_slice %16 {offsets = [0, 4], sizes = [16, 50], strides = [1, 1]} : vector<16x58xf32> to vector<16x50xf32>
    %19 = vector.extract_strided_slice %16 {offsets = [0, 8], sizes = [16, 50], strides = [1, 1]} : vector<16x58xf32> to vector<16x50xf32>
    %20 = tpu.concatenate %17, %18, %19 in 0 : vector<16x50xf32>, vector<16x50xf32>, vector<16x50xf32> -> vector<48x50xf32>
    %c16_6 = arith.constant 16 : index
    %c0_7 = arith.constant 0 : index
    %21 = vector.load %arg1[%c16_6, %c0_7] : memref<272x48xf32, #tpu.memory_space<vmem>>, vector<16x48xf32>
    %cst_8 = arith.constant dense<0.000000e+00> : vector<16x50xf32>
    %22 = tpu.matmul %21, %20, %cst_8 {dimension_numbers = #tpu.dot_dimension_numbers<[1], [0], [0], [1], [0, 0, 1, 1], [], []>} : vector<16x48xf32>, vector<48x50xf32>, vector<16x50xf32> -> vector<16x50xf32>
    %c232 = arith.constant 232 : index
    %c0_9 = arith.constant 0 : index
    %23 = vector.load %arg1[%c232, %c0_9] : memref<272x48xf32, #tpu.memory_space<vmem>>, vector<16x1xf32>
    %24 = vector.broadcast %23 : vector<16x1xf32> to vector<16x50xf32>
    %25 = arith.addf %22, %24 : vector<16x50xf32>
    %cst_10 = arith.constant 0.00999999977 : f32
    %26 = vector.broadcast %cst_10 : f32 to vector<16x50xf32>
    %27 = arith.mulf %26, %25 : vector<16x50xf32>
    %28 = arith.maximumf %25, %27 : vector<16x50xf32>
    %c32 = arith.constant 32 : index
    %c0_11 = arith.constant 0 : index
    %29 = vector.load %arg1[%c32, %c0_11] : memref<272x48xf32, #tpu.memory_space<vmem>>, vector<50x2xf32>
    %cst_12 = arith.constant dense<0.000000e+00> : vector<16x2xf32>
    %30 = tpu.matmul %28, %29, %cst_12 {dimension_numbers = #tpu.dot_dimension_numbers<[1], [0], [0], [1], [0, 0, 1, 1], [], []>} : vector<16x50xf32>, vector<50x2xf32>, vector<16x2xf32> -> vector<16x2xf32>
    %31 = tpu.transpose %30, [1, 0] : vector<16x2xf32> -> vector<2x16xf32>
    %c88 = arith.constant 88 : index
    %c0_13 = arith.constant 0 : index
    %32 = vector.load %arg1[%c88, %c0_13] : memref<272x48xf32, #tpu.memory_space<vmem>>, vector<16x4xf32>
    %cst_14 = arith.constant dense<0.000000e+00> : vector<2x4xf32>
    %33 = tpu.matmul %31, %32, %cst_14 {dimension_numbers = #tpu.dot_dimension_numbers<[1], [0], [0], [1], [0, 0, 1, 1], [], []>} : vector<2x16xf32>, vector<16x4xf32>, vector<2x4xf32> -> vector<2x4xf32>
    %c248 = arith.constant 248 : index
    %c0_15 = arith.constant 0 : index
    %34 = vector.load %arg1[%c248, %c0_15] : memref<272x48xf32, #tpu.memory_space<vmem>>, vector<1x4xf32>
    %35 = vector.broadcast %34 : vector<1x4xf32> to vector<2x4xf32>
    %36 = arith.addf %33, %35 : vector<2x4xf32>
    %cst_16 = arith.constant 0.00999999977 : f32
    %37 = vector.broadcast %cst_16 : f32 to vector<2x4xf32>
    %38 = arith.mulf %37, %36 : vector<2x4xf32>
    %39 = arith.maximumf %36, %38 : vector<2x4xf32>
    %c104 = arith.constant 104 : index
    %c0_17 = arith.constant 0 : index
    %40 = vector.load %arg1[%c104, %c0_17] : memref<272x48xf32, #tpu.memory_space<vmem>>, vector<4x32xf32>
    %cst_18 = arith.constant dense<0.000000e+00> : vector<2x32xf32>
    %41 = tpu.matmul %39, %40, %cst_18 {dimension_numbers = #tpu.dot_dimension_numbers<[1], [0], [0], [1], [0, 0, 1, 1], [], []>} : vector<2x4xf32>, vector<4x32xf32>, vector<2x32xf32> -> vector<2x32xf32>
    %c256 = arith.constant 256 : index
    %c0_19 = arith.constant 0 : index
    %42 = vector.load %arg1[%c256, %c0_19] : memref<272x48xf32, #tpu.memory_space<vmem>>, vector<1x32xf32>
    %43 = vector.broadcast %42 : vector<1x32xf32> to vector<2x32xf32>
    %44 = arith.addf %41, %43 : vector<2x32xf32>
    %cst_20 = arith.constant 0.00999999977 : f32
    %45 = vector.broadcast %cst_20 : f32 to vector<2x32xf32>
    %46 = arith.mulf %45, %44 : vector<2x32xf32>
    %47 = arith.maximumf %44, %46 : vector<2x32xf32>
    %c112 = arith.constant 112 : index
    %c0_21 = arith.constant 0 : index
    %48 = vector.load %arg1[%c112, %c0_21] : memref<272x48xf32, #tpu.memory_space<vmem>>, vector<32x32xf32>
    %49 = arith.mulf %1, %48 : vector<32x32xf32>
    %c144 = arith.constant 144 : index
    %c0_22 = arith.constant 0 : index
    %50 = vector.load %arg1[%c144, %c0_22] : memref<272x48xf32, #tpu.memory_space<vmem>>, vector<2x32xf32>
    %cst_23 = arith.constant dense<0.000000e+00> : vector<2x32xf32>
    %51 = tpu.matmul %50, %49, %cst_23 {dimension_numbers = #tpu.dot_dimension_numbers<[1], [0], [0], [1], [0, 0, 1, 1], [], []>} : vector<2x32xf32>, vector<32x32xf32>, vector<2x32xf32> -> vector<2x32xf32>
    %c264 = arith.constant 264 : index
    %c0_24 = arith.constant 0 : index
    %52 = vector.load %arg1[%c264, %c0_24] : memref<272x48xf32, #tpu.memory_space<vmem>>, vector<1x32xf32>
    %53 = vector.broadcast %52 : vector<1x32xf32> to vector<2x32xf32>
    %54 = arith.addf %51, %53 : vector<2x32xf32>
    %cst_25 = arith.constant 0.00999999977 : f32
    %55 = vector.broadcast %cst_25 : f32 to vector<2x32xf32>
    %56 = arith.mulf %55, %54 : vector<2x32xf32>
    %57 = arith.maximumf %54, %56 : vector<2x32xf32>
    %58 = tpu.concatenate %47, %57 in 1 : vector<2x32xf32>, vector<2x32xf32> -> vector<2x64xf32>
    %c152 = arith.constant 152 : index
    %c0_26 = arith.constant 0 : index
    %59 = vector.load %arg1[%c152, %c0_26] : memref<272x48xf32, #tpu.memory_space<vmem>>, vector<64x2xf32>
    %cst_27 = arith.constant dense<0.000000e+00> : vector<2x2xf32>
    %60 = tpu.matmul %58, %59, %cst_27 {dimension_numbers = #tpu.dot_dimension_numbers<[1], [0], [0], [1], [0, 0, 1, 1], [], []>} : vector<2x64xf32>, vector<64x2xf32>, vector<2x2xf32> -> vector<2x2xf32>
    %61 = math.tanh %60 : vector<2x2xf32>
    %cst_28 = arith.constant 0.000000e+00 : f32
    %62 = vector.broadcast %cst_28 : f32 to vector<2x62xf32>
    %63 = tpu.concatenate %58, %61, %62 in 1 : vector<2x64xf32>, vector<2x2xf32>, vector<2x62xf32> -> vector<2x128xf32>
    %c0_29 = arith.constant 0 : index
    %c0_30 = arith.constant 0 : index
    %64 = vector.load %arg2[%c0_29, %c0_30] : memref<2x128xf32, #tpu.memory_space<vmem>>, vector<2x128xf32>
    tpu.vector_store %arg2[%c0_29, %c0_30], %63 {strides = array<i32>} : memref<2x128xf32, #tpu.memory_space<vmem>>, vector<2x128xf32>,
    return
  }
}

</mosaic_0001>

<llo_original>
// kernel: forward.1
$region0: #{forward.1}
  #allocation0 [shape = 'u32[]', space=smem, size = 0x4, offset = 0x4, fixed_abs, tag = 'smem constant byte address 0x4 - core index']
  #allocation1 [shape = 'u32[144,128]{1,0:T(1,128)}', space=vmem, size = 0x12000, scoped, tag = 'internal scratch']
  %s0 = inlined_call_operand.vmem [shape: f32[48,64], index: 0, kind: input, shape index: {}]
  %s1 = inlined_call_operand.vmem [shape: f32[272,48], index: 1, kind: input, shape index: {}]
  %s2 = inlined_call_operand.vmem [shape: f32[2,128], index: 2, kind: output, shape index: {}]
  %s3 = sld [smem:[#allocation0]]
  $region18: #{forward.1} parent=0
    _
  %s5 = ssub.s32 1, %s3
  %s6 = scalar_select 0, %s5, %s3
  // Predicated region
  $region2: #{forward.1} parent=0 // pred_check
    _
  $region3: #{forward.1} parent=0 // pred_check_branch
    %8 = sbr.rel (0) target = $region5
  $region4: #{forward.1} parent=0 // pred_region
    _
  $region5: #{forward.1} parent=0 // pred_fallthru
    _
  // Predicated region
  $region6: #{forward.1} parent=0 // pred_check
    _
  $region7: #{forward.1} parent=0 // pred_check_branch
    %10 = sbr.rel (0) target = $region9
  $region8: #{forward.1} parent=0 // pred_region
    _
  $region9: #{forward.1} parent=0 // pred_fallthru
    _
  %v11 = vld [vmem:[%s0] sm:$0xff]
  %v12 = vld [vmem:[%s0 + $0x8] sm:$0xff]
  %v13 = vld [vmem:[%s0 + $0x10] sm:$0xff]
  %v14 = vld [vmem:[%s0 + $0x18] sm:$0xff]
  %v15 = vld [vmem:[%s0 + $0x20] sm:$0xff]
  %v16 = vld [vmem:[%s0 + $0x28] sm:$0xff]
  %19 = vrot.lane.b32.xlu0 %v11, 126
  %v20 = vpop.permute.xlu0 %19
  %21 = vrot.lane.b32.xlu0 %v12, 126
  %v22 = vpop.permute.xlu0 %21
  %25 = vrot.lane.b32.xlu0 %v11, 124
  %v26 = vpop.permute.xlu0 %25
  %27 = vrot.lane.b32.xlu0 %v12, 124
  %v28 = vpop.permute.xlu0 %27
  %v31 = vld [vmem:[%s1] sm:$0xff]
  %v32 = vld [vmem:[%s1 + $0x8] sm:$0xff]
  %v33 = vld [vmem:[%s1 + $0xd8] sm:$0xff]
  %v34 = vld [vmem:[%s1 + $0xe0] sm:$0xff]
  %36 = vset.pattern.permute.xlu0 0
  %37 = vperm.xlu0 %36, %v33
  %v38 = vpop.permute.xlu0 %37
  %41 = vset.pattern.permute.xlu0 0
  %42 = vperm.xlu0 %41, %v34
  %v43 = vpop.permute.xlu0 %42
  %vm45 = vcmask 392192
  %v47 = vsel %vm45, %v31, 0
  %v50 = vsel %vm45, %v32, 0
  %52 = vmatprep.subr.mxu0 0.0
  %53 = vmatpush1.msra.mxu0 %v11
  %54 = vmatprep.subr.mxu0 0.0
  %55 = vmatpush1.msra.mxu0 %v12
  %56 = vmatprep.subr.mxu0 0.0
  %57 = vmatpush1.msra.mxu0 %v20
  %58 = vmatprep.subr.mxu0 0.0
  %59 = vmatpush1.msra.mxu0 %v22
  %60 = vmatprep.subr.mxu0 0.0
  %61 = vmatpush1.msra.mxu0 %v26
  %62 = vmatprep.subr.mxu0 0.0
  %63 = vmatpush1.msra.mxu0 %v28
  %64 = vmatprep.subr.mxu0 0.0
  %65 = vmatpush1.msra.mxu0 0.0
  %66 = vmatprep.subr.mxu0 0.0
  %67 = vmatpush1.msra.mxu0 0.0
  %68 = vmatprep.subr.mxu0 0.0
  %69 = vmatpush1.msra.mxu0 0.0
  %70 = vmatprep.subr.mxu0 0.0
  %71 = vmatpush1.msra.mxu0 0.0
  %72 = vmatprep.subr.mxu0 0.0
  %73 = vmatpush1.msra.mxu0 0.0
  %74 = vmatprep.subr.mxu0 0.0
  %75 = vmatpush1.msra.mxu0 0.0
  %76 = vmatprep.subr.mxu0 0.0
  %77 = vmatpush1.msra.mxu0 0.0
  %78 = vmatprep.subr.mxu0 0.0
  %79 = vmatpush1.msra.mxu0 0.0
  %80 = vmatprep.subr.mxu0 0.0
  %81 = vmatpush1.msra.mxu0 0.0
  %82 = vmatprep.subr.mxu0 0.0
  %83 = vmatpush1.msra.mxu0 0.0
  %84 = vmatprep.subr.mxu0 0.0
  %85 = vmatpush1.msra.mxu0 0.0
  %86 = vmatprep.subr.mxu0 0.0
  %87 = vmatpush1.msra.mxu0 0.0
  %88 = vmatprep.subr.mxu0 0.0
  %89 = vmatpush1.msra.mxu0 0.0
  %90 = vmatprep.subr.mxu0 0.0
  %91 = vmatpush1.msra.mxu0 0.0
  %92 = vmatprep.subr.mxu0 0.0
  %93 = vmatpush1.msra.mxu0 0.0
  %94 = vmatprep.subr.mxu0 0.0
  %95 = vmatpush1.msra.mxu0 0.0
  %96 = vmatprep.subr.mxu0 0.0
  %97 = vmatpush1.msra.mxu0 0.0
  %98 = vmatprep.subr.mxu0 0.0
  %99 = vmatpush1.msra.mxu0 0.0
  %100 = vmatprep.subr.mxu0 0.0
  %101 = vmatpush1.msra.mxu0 0.0
  %102 = vmatprep.subr.mxu0 0.0
  %103 = vmatpush1.msra.mxu0 0.0
  %104 = vmatprep.subr.mxu0 0.0
  %105 = vmatpush1.msra.mxu0 0.0
  %106 = vmatprep.subr.mxu0 0.0
  %107 = vmatpush1.msra.mxu0 0.0
  %108 = vmatprep.subr.mxu0 0.0
  %109 = vmatpush1.msra.mxu0 0.0
  %110 = vmatprep.subr.mxu0 0.0
  %111 = vmatpush1.msra.mxu0 0.0
  %112 = vmatprep.subr.mxu0 0.0
  %113 = vmatpush1.msra.mxu0 0.0
  %114 = vmatprep.subr.mxu0 0.0
  %115 = vmatpush1.msra.mxu0 0.0
  %116 = vmatprep.mubr.f32.mxu0 0.0
  %117 = vmatmul.mubr.f32.gmra.mrb[0].mxu0 %v47
  %v118 = vpop.f32.mrb[0].mxu0
  %v119 = vadd.f32 %v38, %v118
  %v120 = vpop.f32.mrb[0].mxu0
  %121 = vmatprep.mubr.f32.mxu0 0.0
  %122 = vmatmul.mubr.f32.gmra.mrb[0].mxu0 %v50
  %v123 = vpop.f32.mrb[0].mxu0
  %v124 = vadd.f32 %v43, %v123
  %v125 = vpop.f32.mrb[0].mxu0
  %126 = vdwg.mxu0
  %v127 = vmul.f32 %v119, 0.01
  %v128 = vmul.f32 %v124, 0.01
  %v129 = vmax.f32 %v119, %v127
  %v130 = vmax.f32 %v124, %v128
  %133 = vrot.lane.b32.xlu0 %v129, 126
  %v134 = vpop.permute.xlu0 %133
  %135 = vrot.lane.b32.xlu0 %v130, 126
  %v136 = vpop.permute.xlu0 %135
  %v139 = vmax.f32 %v129, %v134
  %v140 = vmax.f32 %v130, %v136
  %143 = vrot.lane.b32.xlu0 %v139, 124
  %v144 = vpop.permute.xlu0 %143
  %145 = vrot.lane.b32.xlu0 %v140, 124
  %v146 = vpop.permute.xlu0 %145
  %149 = vrot.lane.b32.xlu0 %v139, 120
  %v150 = vpop.permute.xlu0 %149
  %151 = vrot.lane.b32.xlu0 %v140, 120
  %v152 = vpop.permute.xlu0 %151
  %v155 = vld [vmem:[%s1 + $0x10] sm:$0xff]
  %v156 = vld [vmem:[%s1 + $0x18] sm:$0xff]
  %v157 = vld [vmem:[%s1 + $0xe8] sm:$0xff]
  %v158 = vld [vmem:[%s1 + $0xf0] sm:$0xff]
  %160 = vset.pattern.permute.xlu0 0
  %161 = vperm.xlu0 %160, %v157
  %v162 = vpop.permute.xlu0 %161
  %165 = vset.pattern.permute.xlu0 0
  %166 = vperm.xlu0 %165, %v158
  %v167 = vpop.permute.xlu0 %166
  %v170 = vsel %vm45, %v155, 0
  %v173 = vsel %vm45, %v156, 0
  %175 = vmatprep.subr.mxu0 0.0
  %176 = vmatpush1.msra.mxu0 %v139
  %177 = vmatprep.subr.mxu0 0.0
  %178 = vmatpush1.msra.mxu0 %v140
  %179 = vmatprep.subr.mxu0 0.0
  %180 = vmatpush1.msra.mxu0 %v144
  %181 = vmatprep.subr.mxu0 0.0
  %182 = vmatpush1.msra.mxu0 %v146
  %183 = vmatprep.subr.mxu0 0.0
  %184 = vmatpush1.msra.mxu0 %v150
  %185 = vmatprep.subr.mxu0 0.0
  %186 = vmatpush1.msra.mxu0 %v152
  %187 = vmatprep.subr.mxu0 0.0
  %188 = vmatpush1.msra.mxu0 0.0
  %189 = vmatprep.subr.mxu0 0.0
  %190 = vmatpush1.msra.mxu0 0.0
  %191 = vmatprep.subr.mxu0 0.0
  %192 = vmatpush1.msra.mxu0 0.0
  %193 = vmatprep.subr.mxu0 0.0
  %194 = vmatpush1.msra.mxu0 0.0
  %195 = vmatprep.subr.mxu0 0.0
  %196 = vmatpush1.msra.mxu0 0.0
  %197 = vmatprep.subr.mxu0 0.0
  %198 = vmatpush1.msra.mxu0 0.0
  %199 = vmatprep.subr.mxu0 0.0
  %200 = vmatpush1.msra.mxu0 0.0
  %201 = vmatprep.subr.mxu0 0.0
  %202 = vmatpush1.msra.mxu0 0.0
  %203 = vmatprep.subr.mxu0 0.0
  %204 = vmatpush1.msra.mxu0 0.0
  %205 = vmatprep.subr.mxu0 0.0
  %206 = vmatpush1.msra.mxu0 0.0
  %207 = vmatprep.subr.mxu0 0.0
  %208 = vmatpush1.msra.mxu0 0.0
  %209 = vmatprep.subr.mxu0 0.0
  %210 = vmatpush1.msra.mxu0 0.0
  %211 = vmatprep.subr.mxu0 0.0
  %212 = vmatpush1.msra.mxu0 0.0
  %213 = vmatprep.subr.mxu0 0.0
  %214 = vmatpush1.msra.mxu0 0.0
  %215 = vmatprep.subr.mxu0 0.0
  %216 = vmatpush1.msra.mxu0 0.0
  %217 = vmatprep.subr.mxu0 0.0
  %218 = vmatpush1.msra.mxu0 0.0
  %219 = vmatprep.subr.mxu0 0.0
  %220 = vmatpush1.msra.mxu0 0.0
  %221 = vmatprep.subr.mxu0 0.0
  %222 = vmatpush1.msra.mxu0 0.0
  %223 = vmatprep.subr.mxu0 0.0
  %224 = vmatpush1.msra.mxu0 0.0
  %225 = vmatprep.subr.mxu0 0.0
  %226 = vmatpush1.msra.mxu0 0.0
  %227 = vmatprep.subr.mxu0 0.0
  %228 = vmatpush1.msra.mxu0 0.0
  %229 = vmatprep.subr.mxu0 0.0
  %230 = vmatpush1.msra.mxu0 0.0
  %231 = vmatprep.subr.mxu0 0.0
  %232 = vmatpush1.msra.mxu0 0.0
  %233 = vmatprep.subr.mxu0 0.0
  %234 = vmatpush1.msra.mxu0 0.0
  %235 = vmatprep.subr.mxu0 0.0
  %236 = vmatpush1.msra.mxu0 0.0
  %237 = vmatprep.subr.mxu0 0.0
  %238 = vmatpush1.msra.mxu0 0.0
  %239 = vmatprep.mubr.f32.mxu0 0.0
  %240 = vmatmul.mubr.f32.gmra.mrb[0].mxu0 %v170
  %v241 = vpop.f32.mrb[0].mxu0
  %v242 = vadd.f32 %v162, %v241
  %v243 = vpop.f32.mrb[0].mxu0
  %244 = vmatprep.mubr.f32.mxu0 0.0
  %245 = vmatmul.mubr.f32.gmra.mrb[0].mxu0 %v173
  %v246 = vpop.f32.mrb[0].mxu0
  %v247 = vadd.f32 %v167, %v246
  %v248 = vpop.f32.mrb[0].mxu0
  %249 = vdwg.mxu0
  %v250 = vmul.f32 %v242, 0.01
  %v251 = vmul.f32 %v247, 0.01
  %v252 = vmax.f32 %v242, %v250
  %v253 = vmax.f32 %v247, %v251
  %v254 = vld [vmem:[%s1 + $0x20] sm:$0xff]
  %v255 = vld [vmem:[%s1 + $0x28] sm:$0xff]
  %v256 = vld [vmem:[%s1 + $0x30] sm:$0xff]
  %v257 = vld [vmem:[%s1 + $0x38] sm:$0xff]
  %v258 = vld [vmem:[%s1 + $0x40] sm:$0xff]
  %v259 = vld [vmem:[%s1 + $0x48] sm:$0xff]
  %v260 = vld [vmem:[%s1 + $0x50] sm:$0x3]
  %vm261 = vcmask 408576
  %v263 = vsel %vm261, %v252, 0
  %v266 = vsel %vm261, %v253, 0
  %vm268 = vcmask 1041408
  %v270 = vsel %vm268, %v260, 0
  %272 = vmatprep.subr.mxu0 0.0
  %273 = vmatpush1.msra.mxu0 %v254
  %274 = vmatprep.subr.mxu0 0.0
  %275 = vmatpush1.msra.mxu0 %v255
  %276 = vmatprep.subr.mxu0 0.0
  %277 = vmatpush1.msra.mxu0 %v256
  %278 = vmatprep.subr.mxu0 0.0
  %279 = vmatpush1.msra.mxu0 %v257
  %280 = vmatprep.subr.mxu0 0.0
  %281 = vmatpush1.msra.mxu0 %v258
  %282 = vmatprep.subr.mxu0 0.0
  %283 = vmatpush1.msra.mxu0 %v259
  %284 = vmatprep.subr.mxu0 0.0
  %285 = vmatpush1.msra.mxu0 %v270
  %286 = vmatprep.subr.mxu0 0.0
  %287 = vmatpush1.msra.mxu0 0.0
  %288 = vmatprep.subr.mxu0 0.0
  %289 = vmatpush1.msra.mxu0 0.0
  %290 = vmatprep.subr.mxu0 0.0
  %291 = vmatpush1.msra.mxu0 0.0
  %292 = vmatprep.subr.mxu0 0.0
  %293 = vmatpush1.msra.mxu0 0.0
  %294 = vmatprep.subr.mxu0 0.0
  %295 = vmatpush1.msra.mxu0 0.0
  %296 = vmatprep.subr.mxu0 0.0
  %297 = vmatpush1.msra.mxu0 0.0
  %298 = vmatprep.subr.mxu0 0.0
  %299 = vmatpush1.msra.mxu0 0.0
  %300 = vmatprep.subr.mxu0 0.0
  %301 = vmatpush1.msra.mxu0 0.0
  %302 = vmatprep.subr.mxu0 0.0
  %303 = vmatpush1.msra.mxu0 0.0
  %304 = vmatprep.subr.mxu0 0.0
  %305 = vmatpush1.msra.mxu0 0.0
  %306 = vmatprep.subr.mxu0 0.0
  %307 = vmatpush1.msra.mxu0 0.0
  %308 = vmatprep.subr.mxu0 0.0
  %309 = vmatpush1.msra.mxu0 0.0
  %310 = vmatprep.subr.mxu0 0.0
  %311 = vmatpush1.msra.mxu0 0.0
  %312 = vmatprep.subr.mxu0 0.0
  %313 = vmatpush1.msra.mxu0 0.0
  %314 = vmatprep.subr.mxu0 0.0
  %315 = vmatpush1.msra.mxu0 0.0
  %316 = vmatprep.subr.mxu0 0.0
  %317 = vmatpush1.msra.mxu0 0.0
  %318 = vmatprep.subr.mxu0 0.0
  %319 = vmatpush1.msra.mxu0 0.0
  %320 = vmatprep.subr.mxu0 0.0
  %321 = vmatpush1.msra.mxu0 0.0
  %322 = vmatprep.subr.mxu0 0.0
  %323 = vmatpush1.msra.mxu0 0.0
  %324 = vmatprep.subr.mxu0 0.0
  %325 = vmatpush1.msra.mxu0 0.0
  %326 = vmatprep.subr.mxu0 0.0
  %327 = vmatpush1.msra.mxu0 0.0
  %328 = vmatprep.subr.mxu0 0.0
  %329 = vmatpush1.msra.mxu0 0.0
  %330 = vmatprep.subr.mxu0 0.0
  %331 = vmatpush1.msra.mxu0 0.0
  %332 = vmatprep.subr.mxu0 0.0
  %333 = vmatpush1.msra.mxu0 0.0
  %334 = vmatprep.subr.mxu0 0.0
  %335 = vmatpush1.msra.mxu0 0.0
  %336 = vmatprep.mubr.f32.mxu0 0.0
  %337 = vmatmul.mubr.f32.gmra.mrb[0].mxu0 %v263
  %v338 = vpop.f32.mrb[0].mxu0
  %v339 = vadd.f32 0.0, %v338
  %v340 = vpop.f32.mrb[0].mxu0
  %341 = vmatprep.mubr.f32.mxu0 0.0
  %342 = vmatmul.mubr.f32.gmra.mrb[0].mxu0 %v266
  %v343 = vpop.f32.mrb[0].mxu0
  %v344 = vadd.f32 0.0, %v343
  %v345 = vpop.f32.mrb[0].mxu0
  %346 = vdwg.mxu0
  %347 = vxpose.xlu0.b32.start [1/16] %v339, 128
  %348 = vxpose.xlu0.b32.cont [2/16] %v344, 128
  %349 = vxpose.xlu0.b32.cont [3/16] 0.0, 128
  %350 = vxpose.xlu0.b32.cont [4/16] 0.0, 128
  %351 = vxpose.xlu0.b32.cont [5/16] 0.0, 128
  %352 = vxpose.xlu0.b32.cont [6/16] 0.0, 128
  %353 = vxpose.xlu0.b32.cont [7/16] 0.0, 128
  %354 = vxpose.xlu0.b32.cont [8/16] 0.0, 128
  %355 = vxpose.xlu0.b32.cont [9/16] 0.0, 128
  %356 = vxpose.xlu0.b32.cont [10/16] 0.0, 128
  %357 = vxpose.xlu0.b32.cont [11/16] 0.0, 128
  %358 = vxpose.xlu0.b32.cont [12/16] 0.0, 128
  %359 = vxpose.xlu0.b32.cont [13/16] 0.0, 128
  %360 = vxpose.xlu0.b32.cont [14/16] 0.0, 128
  %361 = vxpose.xlu0.b32.cont [15/16] 0.0, 128
  %362 = vxpose.xlu0.b32.end [16/16] 0.0, 128
  %v363 = vpop.trf.xlu0
  %v364 = vpop.trf.xlu0
  %v365 = vpop.trf.xlu0
  %v366 = vpop.trf.xlu0
  %v367 = vpop.trf.xlu0
  %v368 = vpop.trf.xlu0
  %v369 = vpop.trf.xlu0
  %v370 = vpop.trf.xlu0
  %v371 = vpop.trf.xlu0
  %v372 = vpop.trf.xlu0
  %v373 = vpop.trf.xlu0
  %v374 = vpop.trf.xlu0
  %v375 = vpop.trf.xlu0
  %v376 = vpop.trf.xlu0
  %v377 = vpop.trf.xlu0
  %v378 = vpop.trf.xlu0
  %v379 = vld [vmem:[%s1 + $0x58] sm:$0xff]
  %v380 = vld [vmem:[%s1 + $0x60] sm:$0xff]
  %v381 = vld [vmem:[%s1 + $0xf8] sm:$0x1]
  %v382 = vlaneseq
  %v383 = vshrl.u32 %v382, 7
  %v384 = vsub.s32 0, %v383
  %v385 = vrot.slane %v381, %v384
  %vm386 = vcmask 130048
  %v388 = vsel %vm386, %v363, 0
  %390 = vmatprep.subr.mxu0 0.0
  %391 = vmatpush1.msra.mxu0 %v379
  %392 = vmatprep.subr.mxu0 0.0
  %393 = vmatpush1.msra.mxu0 %v380
  %394 = vmatprep.subr.mxu0 0.0
  %395 = vmatpush1.msra.mxu0 0.0
  %396 = vmatprep.subr.mxu0 0.0
  %397 = vmatpush1.msra.mxu0 0.0
  %398 = vmatprep.subr.mxu0 0.0
  %399 = vmatpush1.msra.mxu0 0.0
  %400 = vmatprep.subr.mxu0 0.0
  %401 = vmatpush1.msra.mxu0 0.0
  %402 = vmatprep.subr.mxu0 0.0
  %403 = vmatpush1.msra.mxu0 0.0
  %404 = vmatprep.subr.mxu0 0.0
  %405 = vmatpush1.msra.mxu0 0.0
  %406 = vmatprep.subr.mxu0 0.0
  %407 = vmatpush1.msra.mxu0 0.0
  %408 = vmatprep.subr.mxu0 0.0
  %409 = vmatpush1.msra.mxu0 0.0
  %410 = vmatprep.subr.mxu0 0.0
  %411 = vmatpush1.msra.mxu0 0.0
  %412 = vmatprep.subr.mxu0 0.0
  %413 = vmatpush1.msra.mxu0 0.0
  %414 = vmatprep.subr.mxu0 0.0
  %415 = vmatpush1.msra.mxu0 0.0
  %416 = vmatprep.subr.mxu0 0.0
  %417 = vmatpush1.msra.mxu0 0.0
  %418 = vmatprep.subr.mxu0 0.0
  %419 = vmatpush1.msra.mxu0 0.0
  %420 = vmatprep.subr.mxu0 0.0
  %421 = vmatpush1.msra.mxu0 0.0
  %422 = vmatprep.subr.mxu0 0.0
  %423 = vmatpush1.msra.mxu0 0.0
  %424 = vmatprep.subr.mxu0 0.0
  %425 = vmatpush1.msra.mxu0 0.0
  %426 = vmatprep.subr.mxu0 0.0
  %427 = vmatpush1.msra.mxu0 0.0
  %428 = vmatprep.subr.mxu0 0.0
  %429 = vmatpush1.msra.mxu0 0.0
  %430 = vmatprep.subr.mxu0 0.0
  %431 = vmatpush1.msra.mxu0 0.0
  %432 = vmatprep.subr.mxu0 0.0
  %433 = vmatpush1.msra.mxu0 0.0
  %434 = vmatprep.subr.mxu0 0.0
  %435 = vmatpush1.msra.mxu0 0.0
  %436 = vmatprep.subr.mxu0 0.0
  %437 = vmatpush1.msra.mxu0 0.0
  %438 = vmatprep.subr.mxu0 0.0
  %439 = vmatpush1.msra.mxu0 0.0
  %440 = vmatprep.subr.mxu0 0.0
  %441 = vmatpush1.msra.mxu0 0.0
  %442 = vmatprep.subr.mxu0 0.0
  %443 = vmatpush1.msra.mxu0 0.0
  %444 = vmatprep.subr.mxu0 0.0
  %445 = vmatpush1.msra.mxu0 0.0
  %446 = vmatprep.subr.mxu0 0.0
  %447 = vmatpush1.msra.mxu0 0.0
  %448 = vmatprep.subr.mxu0 0.0
  %449 = vmatpush1.msra.mxu0 0.0
  %450 = vmatprep.subr.mxu0 0.0
  %451 = vmatpush1.msra.mxu0 0.0
  %452 = vmatprep.subr.mxu0 0.0
  %453 = vmatpush1.msra.mxu0 0.0
  %454 = vmatprep.mubr.f32.mxu0 0.0
  %455 = vmatmul.mubr.f32.gmra.mrb[0].mxu0 %v388
  %v456 = vpop.f32.mrb[0].mxu0
  %v457 = vadd.f32 %v385, %v456
  %v458 = vpop.f32.mrb[0].mxu0
  %459 = vdwg.mxu0
  %v460 = vmul.f32 %v457, 0.01
  %v461 = vmax.f32 %v457, %v460
  %v462 = vld [vmem:[%s1 + $0x68] sm:$0xf]
  %v463 = vld [vmem:[%s1 + $0x100] sm:$0x1]
  %v464 = vlaneseq
  %v465 = vshrl.u32 %v464, 7
  %v466 = vsub.s32 0, %v465
  %v467 = vrot.slane %v463, %v466
  %vm468 = vcmask 31744
  %v470 = vsel %vm468, %v461, 0
  %vm472 = vcmask 1043456
  %v474 = vsel %vm472, %v462, 0
  %476 = vmatprep.subr.mxu0 0.0
  %477 = vmatpush1.msra.mxu0 %v474
  %478 = vmatprep.subr.mxu0 0.0
  %479 = vmatpush1.msra.mxu0 0.0
  %480 = vmatprep.subr.mxu0 0.0
  %481 = vmatpush1.msra.mxu0 0.0
  %482 = vmatprep.subr.mxu0 0.0
  %483 = vmatpush1.msra.mxu0 0.0
  %484 = vmatprep.subr.mxu0 0.0
  %485 = vmatpush1.msra.mxu0 0.0
  %486 = vmatprep.subr.mxu0 0.0
  %487 = vmatpush1.msra.mxu0 0.0
  %488 = vmatprep.subr.mxu0 0.0
  %489 = vmatpush1.msra.mxu0 0.0
  %490 = vmatprep.subr.mxu0 0.0
  %491 = vmatpush1.msra.mxu0 0.0
  %492 = vmatprep.subr.mxu0 0.0
  %493 = vmatpush1.msra.mxu0 0.0
  %494 = vmatprep.subr.mxu0 0.0
  %495 = vmatpush1.msra.mxu0 0.0
  %496 = vmatprep.subr.mxu0 0.0
  %497 = vmatpush1.msra.mxu0 0.0
  %498 = vmatprep.subr.mxu0 0.0
  %499 = vmatpush1.msra.mxu0 0.0
  %500 = vmatprep.subr.mxu0 0.0
  %501 = vmatpush1.msra.mxu0 0.0
  %502 = vmatprep.subr.mxu0 0.0
  %503 = vmatpush1.msra.mxu0 0.0
  %504 = vmatprep.subr.mxu0 0.0
  %505 = vmatpush1.msra.mxu0 0.0
  %506 = vmatprep.subr.mxu0 0.0
  %507 = vmatpush1.msra.mxu0 0.0
  %508 = vmatprep.subr.mxu0 0.0
  %509 = vmatpush1.msra.mxu0 0.0
  %510 = vmatprep.subr.mxu0 0.0
  %511 = vmatpush1.msra.mxu0 0.0
  %512 = vmatprep.subr.mxu0 0.0
  %513 = vmatpush1.msra.mxu0 0.0
  %514 = vmatprep.subr.mxu0 0.0
  %515 = vmatpush1.msra.mxu0 0.0
  %516 = vmatprep.subr.mxu0 0.0
  %517 = vmatpush1.msra.mxu0 0.0
  %518 = vmatprep.subr.mxu0 0.0
  %519 = vmatpush1.msra.mxu0 0.0
  %520 = vmatprep.subr.mxu0 0.0
  %521 = vmatpush1.msra.mxu0 0.0
  %522 = vmatprep.subr.mxu0 0.0
  %523 = vmatpush1.msra.mxu0 0.0
  %524 = vmatprep.subr.mxu0 0.0
  %525 = vmatpush1.msra.mxu0 0.0
  %526 = vmatprep.subr.mxu0 0.0
  %527 = vmatpush1.msra.mxu0 0.0
  %528 = vmatprep.subr.mxu0 0.0
  %529 = vmatpush1.msra.mxu0 0.0
  %530 = vmatprep.subr.mxu0 0.0
  %531 = vmatpush1.msra.mxu0 0.0
  %532 = vmatprep.subr.mxu0 0.0
  %533 = vmatpush1.msra.mxu0 0.0
  %534 = vmatprep.subr.mxu0 0.0
  %535 = vmatpush1.msra.mxu0 0.0
  %536 = vmatprep.subr.mxu0 0.0
  %537 = vmatpush1.msra.mxu0 0.0
  %538 = vmatprep.subr.mxu0 0.0
  %539 = vmatpush1.msra.mxu0 0.0
  %540 = vmatprep.mubr.f32.mxu0 0.0
  %541 = vmatmul.mubr.f32.gmra.mrb[0].mxu0 %v470
  %v542 = vpop.f32.mrb[0].mxu0
  %v543 = vadd.f32 %v467, %v542
  %v544 = vpop.f32.mrb[0].mxu0
  %545 = vdwg.mxu0
  %v546 = vmul.f32 %v543, 0.01
  %v547 = vmax.f32 %v543, %v546
  %v548 = vld [vmem:[%s1 + $0x70] sm:$0xff]
  %v549 = vld [vmem:[%s1 + $0x78] sm:$0xff]
  %v550 = vld [vmem:[%s1 + $0x80] sm:$0xff]
  %v551 = vld [vmem:[%s1 + $0x88] sm:$0xff]
  %v552 = vmul.f32 %v13, %v548
  %v553 = vmul.f32 %v14, %v549
  %v554 = vmul.f32 %v15, %v550
  %v555 = vmul.f32 %v16, %v551
  %v556 = vld [vmem:[%s1 + $0x90] sm:$0x3]
  %v557 = vld [vmem:[%s1 + $0x108] sm:$0x1]
  %v558 = vlaneseq
  %v559 = vshrl.u32 %v558, 7
  %v560 = vsub.s32 0, %v559
  %v561 = vrot.slane %v557, %v560
  %vm562 = vcmask 261120
  %v564 = vsel %vm562, %v556, 0
  %566 = vmatprep.subr.mxu0 0.0
  %567 = vmatpush1.msra.mxu0 %v552
  %568 = vmatprep.subr.mxu0 0.0
  %569 = vmatpush1.msra.mxu0 %v553
  %570 = vmatprep.subr.mxu0 0.0
  %571 = vmatpush1.msra.mxu0 %v554
  %572 = vmatprep.subr.mxu0 0.0
  %573 = vmatpush1.msra.mxu0 %v555
  %574 = vmatprep.subr.mxu0 0.0
  %575 = vmatpush1.msra.mxu0 0.0
  %576 = vmatprep.subr.mxu0 0.0
  %577 = vmatpush1.msra.mxu0 0.0
  %578 = vmatprep.subr.mxu0 0.0
  %579 = vmatpush1.msra.mxu0 0.0
  %580 = vmatprep.subr.mxu0 0.0
  %581 = vmatpush1.msra.mxu0 0.0
  %582 = vmatprep.subr.mxu0 0.0
  %583 = vmatpush1.msra.mxu0 0.0
  %584 = vmatprep.subr.mxu0 0.0
  %585 = vmatpush1.msra.mxu0 0.0
  %586 = vmatprep.subr.mxu0 0.0
  %587 = vmatpush1.msra.mxu0 0.0
  %588 = vmatprep.subr.mxu0 0.0
  %589 = vmatpush1.msra.mxu0 0.0
  %590 = vmatprep.subr.mxu0 0.0
  %591 = vmatpush1.msra.mxu0 0.0
  %592 = vmatprep.subr.mxu0 0.0
  %593 = vmatpush1.msra.mxu0 0.0
  %594 = vmatprep.subr.mxu0 0.0
  %595 = vmatpush1.msra.mxu0 0.0
  %596 = vmatprep.subr.mxu0 0.0
  %597 = vmatpush1.msra.mxu0 0.0
  %598 = vmatprep.subr.mxu0 0.0
  %599 = vmatpush1.msra.mxu0 0.0
  %600 = vmatprep.subr.mxu0 0.0
  %601 = vmatpush1.msra.mxu0 0.0
  %602 = vmatprep.subr.mxu0 0.0
  %603 = vmatpush1.msra.mxu0 0.0
  %604 = vmatprep.subr.mxu0 0.0
  %605 = vmatpush1.msra.mxu0 0.0
  %606 = vmatprep.subr.mxu0 0.0
  %607 = vmatpush1.msra.mxu0 0.0
  %608 = vmatprep.subr.mxu0 0.0
  %609 = vmatpush1.msra.mxu0 0.0
  %610 = vmatprep.subr.mxu0 0.0
  %611 = vmatpush1.msra.mxu0 0.0
  %612 = vmatprep.subr.mxu0 0.0
  %613 = vmatpush1.msra.mxu0 0.0
  %614 = vmatprep.subr.mxu0 0.0
  %615 = vmatpush1.msra.mxu0 0.0
  %616 = vmatprep.subr.mxu0 0.0
  %617 = vmatpush1.msra.mxu0 0.0
  %618 = vmatprep.subr.mxu0 0.0
  %619 = vmatpush1.msra.mxu0 0.0
  %620 = vmatprep.subr.mxu0 0.0
  %621 = vmatpush1.msra.mxu0 0.0
  %622 = vmatprep.subr.mxu0 0.0
  %623 = vmatpush1.msra.mxu0 0.0
  %624 = vmatprep.subr.mxu0 0.0
  %625 = vmatpush1.msra.mxu0 0.0
  %626 = vmatprep.subr.mxu0 0.0
  %627 = vmatpush1.msra.mxu0 0.0
  %628 = vmatprep.subr.mxu0 0.0
  %629 = vmatpush1.msra.mxu0 0.0
  %630 = vmatprep.mubr.f32.mxu0 0.0
  %631 = vmatmul.mubr.f32.gmra.mrb[0].mxu0 %v564
  %v632 = vpop.f32.mrb[0].mxu0
  %v633 = vadd.f32 %v561, %v632
  %v634 = vpop.f32.mrb[0].mxu0
  %635 = vdwg.mxu0
  %v636 = vmul.f32 %v633, 0.01
  %v637 = vmax.f32 %v633, %v636
  %639 = vrot.lane.b32.xlu0 %v637, 32
  %v640 = vpop.permute.xlu0 %639
  %v642 = vsel %vm562, %v547, %v640
  %v643 = vld [vmem:[%s1 + $0x98] sm:$0xff]
  %v644 = vld [vmem:[%s1 + $0xa0] sm:$0xff]
  %v645 = vld [vmem:[%s1 + $0xa8] sm:$0xff]
  %v646 = vld [vmem:[%s1 + $0xb0] sm:$0xff]
  %v647 = vld [vmem:[%s1 + $0xb8] sm:$0xff]
  %v648 = vld [vmem:[%s1 + $0xc0] sm:$0xff]
  %v649 = vld [vmem:[%s1 + $0xc8] sm:$0xff]
  %v650 = vld [vmem:[%s1 + $0xd0] sm:$0xff]
  %vm651 = vcmask 523264
  %v653 = vsel %vm651, %v642, 0
  %655 = vmatprep.subr.mxu0 0.0
  %656 = vmatpush1.msra.mxu0 %v643
  %657 = vmatprep.subr.mxu0 0.0
  %658 = vmatpush1.msra.mxu0 %v644
  %659 = vmatprep.subr.mxu0 0.0
  %660 = vmatpush1.msra.mxu0 %v645
  %661 = vmatprep.subr.mxu0 0.0
  %662 = vmatpush1.msra.mxu0 %v646
  %663 = vmatprep.subr.mxu0 0.0
  %664 = vmatpush1.msra.mxu0 %v647
  %665 = vmatprep.subr.mxu0 0.0
  %666 = vmatpush1.msra.mxu0 %v648
  %667 = vmatprep.subr.mxu0 0.0
  %668 = vmatpush1.msra.mxu0 %v649
  %669 = vmatprep.subr.mxu0 0.0
  %670 = vmatpush1.msra.mxu0 %v650
  %671 = vmatprep.subr.mxu0 0.0
  %672 = vmatpush1.msra.mxu0 0.0
  %673 = vmatprep.subr.mxu0 0.0
  %674 = vmatpush1.msra.mxu0 0.0
  %675 = vmatprep.subr.mxu0 0.0
  %676 = vmatpush1.msra.mxu0 0.0
  %677 = vmatprep.subr.mxu0 0.0
  %678 = vmatpush1.msra.mxu0 0.0
  %679 = vmatprep.subr.mxu0 0.0
  %680 = vmatpush1.msra.mxu0 0.0
  %681 = vmatprep.subr.mxu0 0.0
  %682 = vmatpush1.msra.mxu0 0.0
  %683 = vmatprep.subr.mxu0 0.0
  %684 = vmatpush1.msra.mxu0 0.0
  %685 = vmatprep.subr.mxu0 0.0
  %686 = vmatpush1.msra.mxu0 0.0
  %687 = vmatprep.subr.mxu0 0.0
  %688 = vmatpush1.msra.mxu0 0.0
  %689 = vmatprep.subr.mxu0 0.0
  %690 = vmatpush1.msra.mxu0 0.0
  %691 = vmatprep.subr.mxu0 0.0
  %692 = vmatpush1.msra.mxu0 0.0
  %693 = vmatprep.subr.mxu0 0.0
  %694 = vmatpush1.msra.mxu0 0.0
  %695 = vmatprep.subr.mxu0 0.0
  %696 = vmatpush1.msra.mxu0 0.0
  %697 = vmatprep.subr.mxu0 0.0
  %698 = vmatpush1.msra.mxu0 0.0
  %699 = vmatprep.subr.mxu0 0.0
  %700 = vmatpush1.msra.mxu0 0.0
  %701 = vmatprep.subr.mxu0 0.0
  %702 = vmatpush1.msra.mxu0 0.0
  %703 = vmatprep.subr.mxu0 0.0
  %704 = vmatpush1.msra.mxu0 0.0
  %705 = vmatprep.subr.mxu0 0.0
  %706 = vmatpush1.msra.mxu0 0.0
  %707 = vmatprep.subr.mxu0 0.0
  %708 = vmatpush1.msra.mxu0 0.0
  %709 = vmatprep.subr.mxu0 0.0
  %710 = vmatpush1.msra.mxu0 0.0
  %711 = vmatprep.subr.mxu0 0.0
  %712 = vmatpush1.msra.mxu0 0.0
  %713 = vmatprep.subr.mxu0 0.0
  %714 = vmatpush1.msra.mxu0 0.0
  %715 = vmatprep.subr.mxu0 0.0
  %716 = vmatpush1.msra.mxu0 0.0
  %717 = vmatprep.subr.mxu0 0.0
  %718 = vmatpush1.msra.mxu0 0.0
  %719 = vmatprep.mubr.f32.mxu0 0.0
  %720 = vmatmul.mubr.f32.gmra.mrb[0].mxu0 %v653
  %v721 = vpop.f32.mrb[0].mxu0
  %v722 = vadd.f32 0.0, %v721
  %v723 = vpop.f32.mrb[0].mxu0
  %724 = vdwg.mxu0
  %v725 = vtanh.pop %v722
  %727 = vrot.lane.b32.xlu0 %v725, 64
  %v728 = vpop.permute.xlu0 %727
  %v730 = vsel %vm651, %v642, %v728
  %vm731 = vcmask 539648
  %v732 = vsel %vm731, %v730, 0.0
  %733 = vst [vmem:[%s2] sm:$0x3] %v732
  // Predicated region
  $region10: #{forward.1} parent=0 // pred_check
    _
  $region11: #{forward.1} parent=0 // pred_check_branch
    %735 = sbr.rel (0) target = $region13
  $region12: #{forward.1} parent=0 // pred_region
    _
  $region13: #{forward.1} parent=0 // pred_fallthru
    _
  // Predicated region
  $region14: #{forward.1} parent=0 // pred_check
    _
  $region15: #{forward.1} parent=0 // pred_check_branch
    %737 = sbr.rel (0) target = $region17
  $region16: #{forward.1} parent=0 // pred_region
    _
  $region17: #{forward.1} parent=0 // pred_fallthru
    _

</llo_original>
